<compile_context>
chip_gen: v5e
topology: v5e:2x2
jax: 0.10.0
libtpu: 0.0.40
codegen_flags: <defaults>
</compile_context>

<pallas_src>
import jax
import jax.numpy as jnp
from jax import lax
from jax.experimental import pallas as pl
from jax.experimental.pallas import tpu as pltpu

_INV_SQRT2 = 0.7071067811865476       # 1/sqrt(2)
_SQRT_2_OVER_PI = 0.7978845608028654  # sqrt(2/pi)


def _gelu_exact(x):
    # PyTorch nn.GELU() default: exact erf-based GELU.
    return 0.5 * x * (1.0 + lax.erf(x * _INV_SQRT2))


def _gelu_tanh(x):
    # Optional tanh approximation (EUP path); not PyTorch-default.
    return 0.5 * x * (1.0 + jnp.tanh(_SQRT_2_OVER_PI * (x + 0.044715 * x * x * x)))


def _round_up(v, m):
    return (v + m - 1) // m * m


def _cdiv(a, b):
    return (a + b - 1) // b


def _sublane(dtype):
    # Sublane multiple by element size: f32 -> 8, bf16 -> 16, int8/fp8 -> 32.
    return {4: 8, 2: 16, 1: 32}.get(jnp.dtype(dtype).itemsize, 8)


def _vmem_capacity_bytes():
    try:
        return int(pltpu.get_tpu_info().vmem_capacity_bytes)
    except Exception:
        return 64 << 20  # conservative fallback (v7x per-core VMEM)


def _make_kernel(use_acc, approximate_gelu):
    gelu = _gelu_tanh if approximate_gelu else _gelu_exact

    if use_acc:
        # Narrow output dtype: keep a dedicated f32 accumulator scratch.
        def kernel(x_ref, w1_ref, b1_ref, w2_ref, b2_ref, o_ref, acc_ref):
            hk = pl.program_id(1)

            @pl.when(hk == 0)
            def _():
                acc_ref[...] = jnp.zeros_like(acc_ref)

            # fc1 over this hidden tile: (TM, D) @ (D, TH) -> f32
            h = jnp.dot(x_ref[...], w1_ref[...], preferred_element_type=jnp.float32)
            h = gelu(h + b1_ref[...])
            # dropout(p=0.0) / eval mode -> identity.

            # fc2 partial sum: (TM, TH) @ (TH, D), accumulated in f32.
            acc_ref[...] += jnp.dot(h.astype(w2_ref.dtype), w2_ref[...],
                                    preferred_element_type=jnp.float32)

            @pl.when(hk == pl.num_programs(1) - 1)
            def _():
                o_ref[...] = (acc_ref[...] + b2_ref[...]).astype(o_ref.dtype)

        return kernel

    # f32 output: accumulate directly into the (VMEM-resident) output block.
    def kernel(x_ref, w1_ref, b1_ref, w2_ref, b2_ref, o_ref):
        hk = pl.program_id(1)

        @pl.when(hk == 0)
        def _():
            o_ref[...] = jnp.zeros_like(o_ref)

        h = jnp.dot(x_ref[...], w1_ref[...], preferred_element_type=jnp.float32)
        h = gelu(h + b1_ref[...])
        o_ref[...] += jnp.dot(h.astype(w2_ref.dtype), w2_ref[...],
                              preferred_element_type=jnp.float32)

        @pl.when(hk == pl.num_programs(1) - 1)
        def _():
            o_ref[...] = (o_ref[...] + b2_ref[...]).astype(o_ref.dtype)

    return kernel


def mlp_pallas(x, w1, b1, w2, b2, *, tm_max=512, th_max=512,
               compute_dtype=None, approximate_gelu=False):
    """x: (..., in_dim); w1: (in_dim, hidden); b1: (hidden,);
       w2: (hidden, in_dim); b2: (in_dim,)."""
    in_dim = x.shape[-1]
    hidden = w1.shape[1]
    lead = x.shape[:-1]
    m = 1
    for d in lead:
        m *= d
    out_dtype = x.dtype
    x2d = x.reshape(m, in_dim)

    # Optional lower-precision MXU path (f32 accumulation kept in-kernel).
    if compute_dtype is not None:
        cd = jnp.dtype(compute_dtype)
        x2d = x2d.astype(cd)
        w1 = w1.astype(cd)
        w2 = w2.astype(cd)

    isz = x2d.dtype.itemsize
    wsz = w1.dtype.itemsize
    osz = jnp.dtype(out_dtype).itemsize
    b1sz = b1.dtype.itemsize
    b2sz = b2.dtype.itemsize
    use_acc = jnp.dtype(out_dtype) != jnp.dtype(jnp.float32)
    sub = max(_sublane(x2d.dtype), _sublane(out_dtype))

    dp = _round_up(in_dim, 128)
    hp_full = _round_up(hidden, 128)

    cap = _vmem_capacity_bytes()
    headroom = 8 << 20
    budget = max(16 << 20, cap - headroom)

    def tiles_bytes(tm, th):
        return (2 * tm * dp * isz                      # x tile (double-buffered)
                + 2 * tm * dp * osz                    # out tile
                + (tm * dp * 4 if use_acc else 0)      # f32 accumulator scratch
                + 2 * dp * th * wsz                    # W1 tile
                + 2 * th * dp * wsz                    # W2 tile
                + 2 * 8 * th * b1sz                    # b1 tile (sublane-padded)
                + 2 * 8 * dp * b2sz)                   # b2 tile

    def pick_tm(cap_rows):
        # Balance M tiles instead of always maxing tm (avoids mostly-padded tiles).
        n_tiles = max(1, _cdiv(m, cap_rows))
        tm = _round_up(_cdiv(m, n_tiles), sub)
        tm = min(tm, _round_up(m, sub))
        if _cdiv(m, tm) == 1 and m > sub:
            # Ensure >= 2 M tiles so both v7x TensorCores get work.
            tm = _round_up(_cdiv(m, 2), sub)
        return max(sub, tm)

    # ---- Tile plan ----------------------------------------------------------
    # 1) Prefer keeping both weight matrices fully VMEM-resident: single hidden
    #    tile -> constant weight block index -> weights DMAed from HBM once.
    th = hp_full
    tm = pick_tm(tm_max)
    while tiles_bytes(tm, th) > budget and tm > sub:
        tm = max(sub, _round_up(tm // 2, sub))
    if tiles_bytes(tm, th) > budget:
        # 2) Weights don't fit resident: tile the hidden axis (weights are then
        #    re-streamed once per M tile); shrink whichever side is bigger.
        th = min(_round_up(th_max, 128), hp_full)
        tm = pick_tm(tm_max)
        while tiles_bytes(tm, th) > budget:
            w_bytes = 4 * dp * th * wsz
            a_bytes = tiles_bytes(tm, th) - w_bytes
            if w_bytes >= a_bytes and th > 128:
                th = max(128, _round_up(th // 2, 128))
            elif tm > sub:
                tm = max(sub, _round_up(tm // 2, sub))
            elif th > 128:
                th = max(128, _round_up(th // 2, 128))
            else:
                break

    hp = _round_up(hidden, th)   # pad hidden up to a multiple of th (exact: zeros)
    mp = _round_up(m, tm)
    grid = (mp // tm, hp // th)

    # Lane-dense zero padding (padded x cols / hidden cols / out cols contribute 0).
    # TODO(synk): for production, pre-pad/cast the weights once and cache them
    # instead of padding on every forward call.
    x_p = jnp.pad(x2d, ((0, mp - m), (0, dp - in_dim)))
    w1_p = jnp.pad(w1, ((0, dp - in_dim), (0, hp - hidden)))
    b1_p = jnp.pad(b1, (0, hp - hidden)).reshape(1, hp)
    w2_p = jnp.pad(w2, ((0, hp - hidden), (0, dp - in_dim)))
    b2_p = jnp.pad(b2, (0, dp - in_dim)).reshape(1, dp)

    vmem_limit = int(min(cap, max(32 << 20, tiles_bytes(tm, th) + headroom)))

    weight_passes = 1 if th == hp else (mp // tm)
    cost = pl.CostEstimate(
        flops=4 * m * in_dim * hidden,            # two matmuls
        transcendentals=m * hidden,               # erf/tanh in GELU
        bytes_accessed=(m * in_dim * isz                                   # x
                        + weight_passes * 2 * in_dim * hidden * wsz        # W1, W2
                        + hidden * b1sz + in_dim * b2sz                    # biases
                        + m * in_dim * osz),                               # out
    )

    scratch = [pltpu.VMEM((tm, dp), jnp.float32)] if use_acc else []

    out_p = pl.pallas_call(
        _make_kernel(use_acc, approximate_gelu),
        out_shape=jax.ShapeDtypeStruct((mp, dp), out_dtype),
        grid_spec=pltpu.PrefetchScalarGridSpec(
            num_scalar_prefetch=0,
            grid=grid,
            in_specs=[
                pl.BlockSpec((tm, dp), lambda i, k: (i, 0)),   # x tile (resident over k)
                pl.BlockSpec((dp, th), lambda i, k: (0, k)),   # W1 hidden-column tile
                pl.BlockSpec((1, th), lambda i, k: (0, k)),    # b1 tile
                pl.BlockSpec((th, dp), lambda i, k: (k, 0)),   # W2 hidden-row tile
                pl.BlockSpec((1, dp), lambda i, k: (0, 0)),    # b2 (resident)
            ],
            out_specs=pl.BlockSpec((tm, dp), lambda i, k: (i, 0)),
            scratch_shapes=scratch,
        ),
        compiler_params=pltpu.CompilerParams(
            dimension_semantics=("parallel", "arbitrary"),
            vmem_limit_bytes=vmem_limit,
        ),
        cost_estimate=cost,
    )(x_p, w1_p, b1_p, w2_p, b2_p)

    out2d = out_p[:m, :in_dim]
    return out2d.reshape(*lead, in_dim)


def _reference(x, w1, b1, w2, b2):
    h = jnp.dot(x, w1) + b1
    h = 0.5 * h * (1.0 + lax.erf(h / jnp.sqrt(2.0)))
    return jnp.dot(h, w2) + b2


def _make_params(key, in_dim, hidden, dtype=jnp.float32):
    k1, k2, k3, k4 = jax.random.split(key, 4)
    w1 = jax.random.normal(k1, (in_dim, hidden), dtype=dtype) * 0.05
    b1 = jax.random.normal(k2, (hidden,), dtype=dtype) * 0.05
    w2 = jax.random.normal(k3, (hidden, in_dim), dtype=dtype) * 0.05
    b2 = jax.random.normal(k4, (in_dim,), dtype=dtype) * 0.05
    return w1, b1, w2, b2


if __name__ == "__main__":
    # TODO(synk): training-mode dropout with p>0 (RNG masking) not implemented;
    # module default p=0.0 is an exact identity, as used here.
    run = jax.jit(mlp_pallas)

    key = jax.random.PRNGKey(0)
    kx, kp = jax.random.split(key)

    # Test 1: module-scale small shape (batch=2, seq=8, in_dim=32, hidden=64).
    x = jax.random.normal(kx, (2, 8, 32), dtype=jnp.float32)
    w1, b1, w2, b2 = _make_params(kp, 32, 64)
    out = jax.block_until_ready(run(x, w1, b1, w2, b2))
    ref = _reference(x, w1, b1, w2, b2)
    assert out.shape == x.shape
    assert jnp.allclose(out, ref, atol=1e-5, rtol=1e-5), "mismatch vs reference (test 1)"

    # Test 2: multiple M tiles + feature/hidden padding + resident weights.
    kx2, kp2 = jax.random.split(jax.random.PRNGKey(0), 2)
    x2 = jax.random.normal(kx2, (2, 300, 96), dtype=jnp.float32)
    w1b, b1b, w2b, b2b = _make_params(kp2, 96, 1024)
    out2 = jax.block_until_ready(run(x2, w1b, b1b, w2b, b2b))
    ref2 = _reference(x2, w1b, b1b, w2b, b2b)
    assert out2.shape == x2.shape
    assert jnp.allclose(out2, ref2, atol=1e-4, rtol=1e-4), "mismatch vs reference (test 2)"

    # Test 3: bf16 inputs/weights (exercises the f32-accumulator scratch kernel
    # and the 16-row sublane tile rounding).
    x3 = x.astype(jnp.bfloat16)
    w1c, b1c, w2c, b2c = (p.astype(jnp.bfloat16) for p in (w1, b1, w2, b2))
    out3 = jax.block_until_ready(run(x3, w1c, b1c, w2c, b2c))
    ref3 = _reference(x3.astype(jnp.float32), w1c.astype(jnp.float32),
                      b1c.astype(jnp.float32), w2c.astype(jnp.float32),
                      b2c.astype(jnp.float32))
    assert out3.shape == x3.shape
    assert jnp.allclose(out3.astype(jnp.float32), ref3, atol=2e-2, rtol=2e-2), \
        "mismatch vs reference (test 3, bf16)"

    print("KERNEL_OK")
</pallas_src>

<mosaic_0001>
module attributes {stable_mosaic.version = 11 : i64} {
  func.func @kernel(%arg0: i32, %arg1: i32, %arg2: memref<8x128xf32, #tpu.memory_space<vmem>>, %arg3: memref<128x128xf32, #tpu.memory_space<vmem>>, %arg4: memref<1x128xf32, #tpu.memory_space<vmem>>, %arg5: memref<128x128xf32, #tpu.memory_space<vmem>>, %arg6: memref<1x128xf32, #tpu.memory_space<vmem>>, %arg7: memref<8x128xf32, #tpu.memory_space<vmem>>) attributes {dimension_semantics = [#tpu.dimension_semantics<parallel>, #tpu.dimension_semantics<arbitrary>], iteration_bounds = array<i64: 2, 1>, scalar_prefetch = 0 : i64, scratch_operands = 0 : i64, tpu.core_type = #tpu.core_type<tc>, window_params = [{transform_indices = @transform_0, window_bounds = array<i64: 8, 128>}, {transform_indices = @transform_1, window_bounds = array<i64: 128, 128>}, {transform_indices = @transform_2, window_bounds = array<i64: 1, 128>}, {transform_indices = @transform_3, window_bounds = array<i64: 128, 128>}, {pipeline_mode = #tpu.pipeline_mode<synchronous>, transform_indices = @transform_4, window_bounds = array<i64: 1, 128>}, {transform_indices = @transform_5, window_bounds = array<i64: 8, 128>}]} {
    %c0_i32 = arith.constant 0 : i32
    %0 = arith.cmpi eq, %arg1, %c0_i32 : i32
    %1 = arith.extui %0 : i1 to i32
    %c0_i32_0 = arith.constant 0 : i32
    %2 = arith.cmpi ne, %1, %c0_i32_0 : i32
    scf.if %2 {
      %cst_18 = arith.constant 0.000000e+00 : f32
      %25 = vector.broadcast %cst_18 : f32 to vector<8x128xf32>
      %c0_19 = arith.constant 0 : index
      %c0_20 = arith.constant 0 : index
      %26 = vector.load %arg7[%c0_19, %c0_20] : memref<8x128xf32, #tpu.memory_space<vmem>>, vector<8x128xf32>
      tpu.vector_store %arg7[%c0_19, %c0_20], %25 {strides = array<i32>} : memref<8x128xf32, #tpu.memory_space<vmem>>, vector<8x128xf32>,
    } else {
    }
    %c0 = arith.constant 0 : index
    %c0_1 = arith.constant 0 : index
    %3 = vector.load %arg2[%c0, %c0_1] : memref<8x128xf32, #tpu.memory_space<vmem>>, vector<8x128xf32>
    %c0_2 = arith.constant 0 : index
    %c0_3 = arith.constant 0 : index
    %4 = vector.load %arg3[%c0_2, %c0_3] : memref<128x128xf32, #tpu.memory_space<vmem>>, vector<128x128xf32>
    %cst = arith.constant dense<0.000000e+00> : vector<8x128xf32>
    %5 = tpu.matmul %3, %4, %cst {dimension_numbers = #tpu.dot_dimension_numbers<[1], [0], [0], [1], [0, 0, 1, 1], [], []>} : vector<8x128xf32>, vector<128x128xf32>, vector<8x128xf32> -> vector<8x128xf32>
    %c0_4 = arith.constant 0 : index
    %c0_5 = arith.constant 0 : index
    %6 = vector.load %arg4[%c0_4, %c0_5] : memref<1x128xf32, #tpu.memory_space<vmem>>, vector<1x128xf32>
    %7 = vector.broadcast %6 : vector<1x128xf32> to vector<8x128xf32>
    %8 = arith.addf %5, %7 : vector<8x128xf32>
    %cst_6 = arith.constant 5.000000e-01 : f32
    %9 = vector.broadcast %cst_6 : f32 to vector<8x128xf32>
    %10 = arith.mulf %9, %8 : vector<8x128xf32>
    %cst_7 = arith.constant 0.707106769 : f32
    %11 = vector.broadcast %cst_7 : f32 to vector<8x128xf32>
    %12 = arith.mulf %8, %11 : vector<8x128xf32>
    %13 = math.erf %12 : vector<8x128xf32>
    %cst_8 = arith.constant 1.000000e+00 : f32
    %14 = vector.broadcast %cst_8 : f32 to vector<8x128xf32>
    %15 = arith.addf %14, %13 : vector<8x128xf32>
    %16 = arith.mulf %10, %15 : vector<8x128xf32>
    %c0_9 = arith.constant 0 : index
    %c0_10 = arith.constant 0 : index
    %17 = vector.load %arg7[%c0_9, %c0_10] : memref<8x128xf32, #tpu.memory_space<vmem>>, vector<8x128xf32>
    %c0_11 = arith.constant 0 : index
    %c0_12 = arith.constant 0 : index
    %18 = vector.load %arg5[%c0_11, %c0_12] : memref<128x128xf32, #tpu.memory_space<vmem>>, vector<128x128xf32>
    %cst_13 = arith.constant dense<0.000000e+00> : vector<8x128xf32>
    %19 = tpu.matmul %16, %18, %cst_13 {dimension_numbers = #tpu.dot_dimension_numbers<[1], [0], [0], [1], [0, 0, 1, 1], [], []>} : vector<8x128xf32>, vector<128x128xf32>, vector<8x128xf32> -> vector<8x128xf32>
    %20 = arith.addf %17, %19 : vector<8x128xf32>
    %c0_14 = arith.constant 0 : index
    %c0_15 = arith.constant 0 : index
    %21 = vector.load %arg7[%c0_14, %c0_15] : memref<8x128xf32, #tpu.memory_space<vmem>>, vector<8x128xf32>
    tpu.vector_store %arg7[%c0_14, %c0_15], %20 {strides = array<i32>} : memref<8x128xf32, #tpu.memory_space<vmem>>, vector<8x128xf32>,
    %c0_i32_16 = arith.constant 0 : i32
    %22 = arith.cmpi eq, %arg1, %c0_i32_16 : i32
    %23 = arith.extui %22 : i1 to i32
    %c0_i32_17 = arith.constant 0 : i32
    %24 = arith.cmpi ne, %23, %c0_i32_17 : i32
    scf.if %24 {
      %c0_18 = arith.constant 0 : index
      %c0_19 = arith.constant 0 : index
      %25 = vector.load %arg7[%c0_18, %c0_19] : memref<8x128xf32, #tpu.memory_space<vmem>>, vector<8x128xf32>
      %c0_20 = arith.constant 0 : index
      %c0_21 = arith.constant 0 : index
      %26 = vector.load %arg6[%c0_20, %c0_21] : memref<1x128xf32, #tpu.memory_space<vmem>>, vector<1x128xf32>
      %27 = vector.broadcast %26 : vector<1x128xf32> to vector<8x128xf32>
      %28 = arith.addf %25, %27 : vector<8x128xf32>
      %c0_22 = arith.constant 0 : index
      %c0_23 = arith.constant 0 : index
      %29 = vector.load %arg7[%c0_22, %c0_23] : memref<8x128xf32, #tpu.memory_space<vmem>>, vector<8x128xf32>
      tpu.vector_store %arg7[%c0_22, %c0_23], %28 {strides = array<i32>} : memref<8x128xf32, #tpu.memory_space<vmem>>, vector<8x128xf32>,
    } else {
    }
    return
  }
  func.func @transform_0(%arg0: i32, %arg1: i32) -> (i32, i32) {
    %c0_i32 = arith.constant 0 : i32
    %c0_i32_0 = arith.constant 0 : i32
    return %arg0, %c0_i32 : i32, i32
  }
  func.func @transform_1(%arg0: i32, %arg1: i32) -> (i32, i32) {
    %c0_i32 = arith.constant 0 : i32
    %c0_i32_0 = arith.constant 0 : i32
    return %c0_i32, %arg1 : i32, i32
  }
  func.func @transform_2(%arg0: i32, %arg1: i32) -> (i32, i32) {
    %c0_i32 = arith.constant 0 : i32
    %c0_i32_0 = arith.constant 0 : i32
    return %c0_i32, %arg1 : i32, i32
  }
  func.func @transform_3(%arg0: i32, %arg1: i32) -> (i32, i32) {
    %c0_i32 = arith.constant 0 : i32
    %c0_i32_0 = arith.constant 0 : i32
    return %arg1, %c0_i32 : i32, i32
  }
  func.func @transform_4(%arg0: i32, %arg1: i32) -> (i32, i32) {
    %c0_i32 = arith.constant 0 : i32
    %c0_i32_0 = arith.constant 0 : i32
    %c0_i32_1 = arith.constant 0 : i32
    return %c0_i32, %c0_i32_0 : i32, i32
  }
  func.func @transform_5(%arg0: i32, %arg1: i32) -> (i32, i32) {
    %c0_i32 = arith.constant 0 : i32
    %c0_i32_0 = arith.constant 0 : i32
    return %arg0, %c0_i32 : i32, i32
  }
}

</mosaic_0001>

<llo_original>
// kernel: mlp_pallas.1
$region0: #{mlp_pallas.1}
  #allocation0 [shape = 'u32[]', space=smem, size = 0x4, offset = 0x4, fixed_abs, tag = 'smem constant byte address 0x4 - core index']
  #allocation1 [shape = 'u32[72,128]{1,0:T(1,128)}', space=vmem, size = 0x9000, scoped, tag = 'internal scratch']
  %s0 = inlined_call_operand.vmem [shape: f32[16,128], index: 0, kind: input, shape index: {}]
  %s1 = inlined_call_operand.vmem [shape: f32[128,128], index: 1, kind: input, shape index: {}]
  %s2 = inlined_call_operand.vmem [shape: f32[1,128], index: 2, kind: input, shape index: {}]
  %s3 = inlined_call_operand.vmem [shape: f32[128,128], index: 3, kind: input, shape index: {}]
  %s4 = inlined_call_operand.vmem [shape: f32[1,128], index: 4, kind: input, shape index: {}]
  %s5 = inlined_call_operand.vmem [shape: f32[16,128], index: 5, kind: output, shape index: {}]
  %s6 = sld [smem:[#allocation0]]
  $region61: #{mlp_pallas.1} parent=0
    _
  %s8 = ssub.s32 1, %s6
  %s9 = scalar_select 0, %s8, %s6
  loop: start=0, step=1, limit=4
  $region2: #{mlp_pallas.1} parent=0 // loop_pre_header
    _
  $region3: #{mlp_pallas.1} parent=0 // loop_header
    %s11 = sphi 0, %s15
    %p12 = scmp.ge.s32.totalorder %s11, 4
    %s18 = sphi 0, %s30
    %s19 = sphi 0, %s26
    %s20 = sphi 0, %s18
    %s21 = sphi 0, %s19
    %s22 = sphi 0, %s20
    %s23 = sphi 0, %s21
    %s33 = sphi 0, %s35
    %s36 = sphi 0, %s33
    %s37 = sphi 0, %s36
    %s53 = sphi 0, %s37
    %s59 = sphi 0, %s61
    %s62 = sphi 0, %s59
    %s63 = sphi 0, %s62
    %s79 = sphi 0, %s63
    %s85 = sphi 0, %s87
    %s88 = sphi 0, %s85
    %s89 = sphi 0, %s88
    %s105 = sphi 0, %s89
    %s111 = sphi 0, %s113
    %s114 = sphi 0, %s111
    %s115 = sphi 0, %s114
    %s131 = sphi 0, %s115
    %s135 = sphi 0, %s135
    %s137 = sphi 0, %s135
    %s138 = sphi 0, %s137
    %s152 = sphi 0, %s138
    %s158 = sphi 0, %s160
    %s161 = sphi 0, %s158
    %s162 = sphi 0, %s161
    %s178 = sphi 0, %s162
  $region4: #{mlp_pallas.1} parent=0 // loop_header_branch
    %14 = sbr.rel (%p12) target = $region8
  $region5: #{mlp_pallas.1} parent=0 // loop_body
    %s16 = ssub.s32 %s11, 1
    %s17 = ssub.s32 %s11, 2
    %s24 = sadd.s32 1, %s19
    %p25 = scmp.ge.s32.totalorder %s24, 1
    %s26 = scalar_select %p25, 0, %s24
    %s27 = sadd.s32 1, %s18
    %s28 = scalar_select %p25, %s27, %s18
    %p29 = scmp.ge.s32.totalorder %s28, 2
    %s30 = scalar_select %p29, 0, %s28
    %s31 = ssub.s32 %s18, %s30
    %p32 = scmp.eq.s32.totalorder %s31, 0
    %s34 = sadd.s32 %s33, 1
    %s35 = scalar_select %p32, %s33, %s34
    %p38 = pneg %p32
    %p39 = scmp.eq.s32.totalorder %s11, 1
    %p40 = por %p38, %p39
    %p41 = scmp.ne.s32.totalorder %s33, %s36
    %p42 = scmp.eq.s32.totalorder %s11, 0
    %p43 = por %p41, %p42
    %p44 = scmp.ne.s32.totalorder %s33, %s36
    %p45 = scmp.eq.s32.totalorder %s16, 1
    %p46 = por %p44, %p45
    %p47 = scmp.ne.s32.totalorder %s36, %s37
    %p48 = scmp.eq.s32.totalorder %s16, 0
    %p49 = por %p47, %p48
    %p50 = scmp.ne.s32.totalorder %s36, %s37
    %p51 = scmp.eq.s32.totalorder %s17, 1
    %p52 = por %p50, %p51
    %p54 = scmp.ne.s32.totalorder %s37, %s53
    %p55 = scmp.eq.s32.totalorder %s17, 0
    %p56 = por %p54, %p55
    %s57 = ssub.s32 %s19, %s26
    %p58 = scmp.eq.s32.totalorder %s57, 0
    %s60 = sadd.s32 %s59, 1
    %s61 = scalar_select %p58, %s59, %s60
    %p64 = pneg %p58
    %p65 = scmp.eq.s32.totalorder %s11, 1
    %p66 = por %p64, %p65
    %p67 = scmp.ne.s32.totalorder %s59, %s62
    %p68 = scmp.eq.s32.totalorder %s11, 0
    %p69 = por %p67, %p68
    %p70 = scmp.ne.s32.totalorder %s59, %s62
    %p71 = scmp.eq.s32.totalorder %s16, 1
    %p72 = por %p70, %p71
    %p73 = scmp.ne.s32.totalorder %s62, %s63
    %p74 = scmp.eq.s32.totalorder %s16, 0
    %p75 = por %p73, %p74
    %p76 = scmp.ne.s32.totalorder %s62, %s63
    %p77 = scmp.eq.s32.totalorder %s17, 1
    %p78 = por %p76, %p77
    %p80 = scmp.ne.s32.totalorder %s63, %s79
    %p81 = scmp.eq.s32.totalorder %s17, 0
    %p82 = por %p80, %p81
    %s83 = ssub.s32 %s19, %s26
    %p84 = scmp.eq.s32.totalorder %s83, 0
    %s86 = sadd.s32 %s85, 1
    %s87 = scalar_select %p84, %s85, %s86
    %p90 = pneg %p84
    %p91 = scmp.eq.s32.totalorder %s11, 1
    %p92 = por %p90, %p91
    %p93 = scmp.ne.s32.totalorder %s85, %s88
    %p94 = scmp.eq.s32.totalorder %s11, 0
    %p95 = por %p93, %p94
    %p96 = scmp.ne.s32.totalorder %s85, %s88
    %p97 = scmp.eq.s32.totalorder %s16, 1
    %p98 = por %p96, %p97
    %p99 = scmp.ne.s32.totalorder %s88, %s89
    %p100 = scmp.eq.s32.totalorder %s16, 0
    %p101 = por %p99, %p100
    %p102 = scmp.ne.s32.totalorder %s88, %s89
    %p103 = scmp.eq.s32.totalorder %s17, 1
    %p104 = por %p102, %p103
    %p106 = scmp.ne.s32.totalorder %s89, %s105
    %p107 = scmp.eq.s32.totalorder %s17, 0
    %p108 = por %p106, %p107
    %s109 = ssub.s32 %s19, %s26
    %p110 = scmp.eq.s32.totalorder %s109, 0
    %s112 = sadd.s32 %s111, 1
    %s113 = scalar_select %p110, %s111, %s112
    %p116 = pneg %p110
    %p117 = scmp.eq.s32.totalorder %s11, 1
    %p118 = por %p116, %p117
    %p119 = scmp.ne.s32.totalorder %s111, %s114
    %p120 = scmp.eq.s32.totalorder %s11, 0
    %p121 = por %p119, %p120
    %p122 = scmp.ne.s32.totalorder %s111, %s114
    %p123 = scmp.eq.s32.totalorder %s16, 1
    %p124 = por %p122, %p123
    %p125 = scmp.ne.s32.totalorder %s114, %s115
    %p126 = scmp.eq.s32.totalorder %s16, 0
    %p127 = por %p125, %p126
    %p128 = scmp.ne.s32.totalorder %s114, %s115
    %p129 = scmp.eq.s32.totalorder %s17, 1
    %p130 = por %p128, %p129
    %p132 = scmp.ne.s32.totalorder %s115, %s131
    %p133 = scmp.eq.s32.totalorder %s17, 0
    %p134 = por %p132, %p133
    %s136 = sadd.s32 %s135, 1
    %p139 = scmp.eq.s32.totalorder %s11, 1
    %p140 = scmp.ne.s32.totalorder %s135, %s137
    %p141 = scmp.eq.s32.totalorder %s11, 0
    %p142 = por %p140, %p141
    %p143 = scmp.ne.s32.totalorder %s135, %s137
    %p144 = scmp.eq.s32.totalorder %s16, 1
    %p145 = por %p143, %p144
    %p146 = scmp.ne.s32.totalorder %s137, %s138
    %p147 = scmp.eq.s32.totalorder %s16, 0
    %p148 = por %p146, %p147
    %p149 = scmp.ne.s32.totalorder %s137, %s138
    %p150 = scmp.eq.s32.totalorder %s17, 1
    %p151 = por %p149, %p150
    %p153 = scmp.ne.s32.totalorder %s138, %s152
    %p154 = scmp.eq.s32.totalorder %s17, 0
    %p155 = por %p153, %p154
    %s156 = ssub.s32 %s18, %s30
    %p157 = scmp.eq.s32.totalorder %s156, 0
    %s159 = sadd.s32 %s158, 1
    %s160 = scalar_select %p157, %s158, %s159
    %p163 = pneg %p157
    %p164 = scmp.eq.s32.totalorder %s11, 1
    %p165 = por %p163, %p164
    %p166 = scmp.ne.s32.totalorder %s158, %s161
    %p167 = scmp.eq.s32.totalorder %s11, 0
    %p168 = por %p166, %p167
    %p169 = scmp.ne.s32.totalorder %s158, %s161
    %p170 = scmp.eq.s32.totalorder %s16, 1
    %p171 = por %p169, %p170
    %p172 = scmp.ne.s32.totalorder %s161, %s162
    %p173 = scmp.eq.s32.totalorder %s16, 0
    %p174 = por %p172, %p173
    %p175 = scmp.ne.s32.totalorder %s161, %s162
    %p176 = scmp.eq.s32.totalorder %s17, 1
    %p177 = por %p175, %p176
    %p179 = scmp.ne.s32.totalorder %s162, %s178
    %p180 = scmp.eq.s32.totalorder %s17, 0
    %p181 = por %p179, %p180
    %p182 = scmp.le.s32.totalorder 1, %s11
    %p183 = scmp.lt.s32.totalorder %s11, 3
    %p184 = pnand %p182, %p183
    %p185 = pneg %p184
    // Predicated region
    $region9: #{mlp_pallas.1} parent=5 // pred_check
      _
    $region10: #{mlp_pallas.1} parent=5 // pred_check_branch
      %187 = sbr.rel (%p184) target = $region12
    $region11: #{mlp_pallas.1} parent=5 // pred_region
      %s188 = ssub.s32 %s11, 1
      // Predicated region
      $region13: #{mlp_pallas.1} parent=11 // pred_check
        %p189 = pneg %p75
      $region14: #{mlp_pallas.1} parent=11 // pred_check_branch
        %191 = sbr.rel (%p189) target = $region16
      $region15: #{mlp_pallas.1} parent=11 // pred_region
        %p192 = scmp.lt.s32.totalorder %s21, 0
        %s193 = scalar_select %p192, %s21, 0
        %s194 = smul.addr %s193, 8
        %s195 = scalar_lea.vmem %s1, %s194
      $region16: #{mlp_pallas.1} parent=11 // pred_fallthru
        _
      // Predicated region
      $region17: #{mlp_pallas.1} parent=11 // pred_check
        %p196 = pneg %p101
      $region18: #{mlp_pallas.1} parent=11 // pred_check_branch
        %198 = sbr.rel (%p196) target = $region20
      $region19: #{mlp_pallas.1} parent=11 // pred_region
        %p199 = scmp.lt.s32.totalorder %s21, 0
        %s200 = scalar_select %p199, %s21, 0
        %s201 = scalar_lea.vmem %s2, %s200
      $region20: #{mlp_pallas.1} parent=11 // pred_fallthru
        _
      // Predicated region
      $region21: #{mlp_pallas.1} parent=11 // pred_check
        %p202 = pneg %p127
      $region22: #{mlp_pallas.1} parent=11 // pred_check_branch
        %204 = sbr.rel (%p202) target = $region24
      $region23: #{mlp_pallas.1} parent=11 // pred_region
        %s205 = smul.u32 16, %s21
        %p206 = scmp.lt.s32.totalorder %s205, 15
        %s207 = scalar_select %p206, %s205, 15
        %s208 = smul.addr %s207, 8
        %s209 = scalar_lea.vmem %s3, %s208
        %s210 = smul.u32 16, %s21
      $region24: #{mlp_pallas.1} parent=11 // pred_fallthru
        _
      // Predicated region
      $region25: #{mlp_pallas.1} parent=11 // pred_check
        %p211 = pneg %p148
      $region26: #{mlp_pallas.1} parent=11 // pred_check_branch
        %213 = sbr.rel (%p211) target = $region28
      $region27: #{mlp_pallas.1} parent=11 // pred_region
        _
      $region28: #{mlp_pallas.1} parent=11 // pred_fallthru
        _
    $region12: #{mlp_pallas.1} parent=5 // pred_fallthru
      _
    %p214 = scmp.lt.s32.totalorder %s11, 2
    // Predicated region
    $region29: #{mlp_pallas.1} parent=5 // pred_check
      %p215 = pneg %p214
    $region30: #{mlp_pallas.1} parent=5 // pred_check_branch
      %217 = sbr.rel (%p215) target = $region32
    $region31: #{mlp_pallas.1} parent=5 // pred_region
      // Predicated region
      $region33: #{mlp_pallas.1} parent=31 // pred_check
        %p218 = pneg %p43
      $region34: #{mlp_pallas.1} parent=31 // pred_check_branch
        %220 = sbr.rel (%p218) target = $region36
      $region35: #{mlp_pallas.1} parent=31 // pred_region
        %p221 = scmp.lt.s32.totalorder %s18, 1
        %s222 = scalar_select %p221, %s18, 1
        %s223 = smul.addr %s222, 8
        %s224 = scalar_lea.vmem %s0, %s223
      $region36: #{mlp_pallas.1} parent=31 // pred_fallthru
        _
    $region32: #{mlp_pallas.1} parent=5 // pred_fallthru
      _
    %p225 = scmp.le.s32.totalorder 1, %s11
    %p226 = scmp.lt.s32.totalorder %s11, 3
    %p227 = pnand %p225, %p226
    %p228 = pneg %p227
    // Predicated region
    $region37: #{mlp_pallas.1} parent=5 // pred_check
      _
    $region38: #{mlp_pallas.1} parent=5 // pred_check_branch
      %230 = sbr.rel (%p227) target = $region40
    $region39: #{mlp_pallas.1} parent=5 // pred_region
      %s231 = ssub.s32 %s11, 1
      %p232 = scmp.lt.s32.totalorder %s20, 1
      %s233 = scalar_select %p232, %s20, 1
      %s234 = smul.addr %s233, 8
      %s235 = scalar_lea.vmem %s0, %s234
      %p236 = pneg %p49
      %p237 = pneg %p46
      %p238 = scmp.lt.s32.totalorder %s21, 0
      %s239 = scalar_select %p238, %s21, 0
      %s240 = smul.addr %s239, 8
      %s241 = scalar_lea.vmem %s1, %s240
      %p242 = pneg %p75
      %p243 = pneg %p72
      %p244 = scmp.lt.s32.totalorder %s21, 0
      %s245 = scalar_select %p244, %s21, 0
      %s246 = scalar_lea.vmem %s2, %s245
      %p247 = pneg %p101
      %p248 = pneg %p98
      %s249 = smul.u32 16, %s21
      %p250 = scmp.lt.s32.totalorder %s249, 15
      %s251 = scalar_select %p250, %s249, 15
      %s252 = smul.addr %s251, 8
      %s253 = scalar_lea.vmem %s3, %s252
      %p254 = pneg %p127
      %p255 = pneg %p124
      %p256 = pneg %p148
      %p257 = pneg %p145
      %p258 = pneg %p174
      %p259 = pneg %p171
      %p260 = scmp.lt.s32.totalorder %s20, 1
      %s261 = scalar_select %p260, %s20, 1
      %s262 = smul.addr %s261, 8
      %s263 = scalar_lea.vmem %s5, %s262
      %p264 = scmp.lt.s32.totalorder %s20, 1
      %s265 = scalar_select %p264, %s20, 1
      %s266 = smul.addr %s265, 8
      %s267 = scalar_lea.vmem %s0, %s266
      %p268 = scmp.lt.s32.totalorder %s21, 0
      %s269 = scalar_select %p268, %s21, 0
      %s270 = smul.addr %s269, 8
      %s271 = scalar_lea.vmem %s1, %s270
      %p272 = scmp.lt.s32.totalorder %s21, 0
      %s273 = scalar_select %p272, %s21, 0
      %s274 = scalar_lea.vmem %s2, %s273
      %s275 = smul.u32 16, %s21
      %p276 = scmp.lt.s32.totalorder %s275, 15
      %s277 = scalar_select %p276, %s275, 15
      %s278 = smul.addr %s277, 8
      %s279 = scalar_lea.vmem %s3, %s278
      %s280 = smul.u32 16, %s21
      %p281 = scmp.lt.s32.totalorder %s20, 1
      %s282 = scalar_select %p281, %s20, 1
      %s283 = smul.addr %s282, 8
      %s284 = scalar_lea.vmem %s5, %s283
      %p285 = scmp.eq.s32.totalorder %s21, 0
      // Predicated region
      $region41: #{mlp_pallas.1} parent=39 // pred_check
        %p286 = pneg %p285
      $region42: #{mlp_pallas.1} parent=39 // pred_check_branch
        %288 = sbr.rel (%p286) target = $region44
      $region43: #{mlp_pallas.1} parent=39 // pred_region
        %289 = vst [vmem:[%s284] sm:$0xff] 0.0
      $region44: #{mlp_pallas.1} parent=39 // pred_fallthru
        _
      %v290 = vld [vmem:[%s267] sm:$0xff]
      %v291 = vld [vmem:[%s271] sm:$0xff]
      %v292 = vld [vmem:[%s271 + $0x8] sm:$0xff]
      %v293 = vld [vmem:[%s271 + $0x10] sm:$0xff]
      %v294 = vld [vmem:[%s271 + $0x18] sm:$0xff]
      %v295 = vld [vmem:[%s271 + $0x20] sm:$0xff]
      %v296 = vld [vmem:[%s271 + $0x28] sm:$0xff]
      %v297 = vld [vmem:[%s271 + $0x30] sm:$0xff]
      %v298 = vld [vmem:[%s271 + $0x38] sm:$0xff]
      %v299 = vld [vmem:[%s271 + $0x40] sm:$0xff]
      %v300 = vld [vmem:[%s271 + $0x48] sm:$0xff]
      %v301 = vld [vmem:[%s271 + $0x50] sm:$0xff]
      %v302 = vld [vmem:[%s271 + $0x58] sm:$0xff]
      %v303 = vld [vmem:[%s271 + $0x60] sm:$0xff]
      %v304 = vld [vmem:[%s271 + $0x68] sm:$0xff]
      %v305 = vld [vmem:[%s271 + $0x70] sm:$0xff]
      %v306 = vld [vmem:[%s271 + $0x78] sm:$0xff]
      %v307 = vld [vmem:[%s274] sm:$0x1]
      %v309 = vperm.slane %v307, 0
      %311 = vmatpush.msra.mxu0 %v306
      %312 = vmatpush.msra.mxu0 %v305
      %313 = vmatpush.msra.mxu0 %v304
      %314 = vmatpush.msra.mxu0 %v303
      %315 = vmatpush.msra.mxu0 %v302
      %316 = vmatpush.msra.mxu0 %v301
      %317 = vmatpush.msra.mxu0 %v300
      %318 = vmatpush.msra.mxu0 %v299
      %319 = vmatpush.msra.mxu0 %v298
      %320 = vmatpush.msra.mxu0 %v297
      %321 = vmatpush.msra.mxu0 %v296
      %322 = vmatpush.msra.mxu0 %v295
      %323 = vmatpush.msra.mxu0 %v294
      %324 = vmatpush.msra.mxu0 %v293
      %325 = vmatpush.msra.mxu0 %v292
      %326 = vmatpush.msra.mxu0 %v291
      %327 = vmatmul.f32.gmra.mxu0 %v290
      %v328 = vpop.f32.mrf.mxu0
      %v329 = vadd.f32 %v309, %v328
      %330 = vdwg.mxu0
      %v331 = vmul.f32 %v329, 0.5
      %v332 = vmul.f32 %v329, 0.70710677
      %v333 = vmul.f32 %v332, %v332
      %v334 = vmin.f32 16.0, %v333
      %v335 = vmul.f32 %v334, 2.1237322e-06
      %v336 = vadd.f32 %v335, 0.00028619796
      %v337 = vmul.f32 %v334, %v336
      %v338 = vadd.f32 %v337, 0.0036580483
      %v339 = vmul.f32 %v334, %v338
      %v340 = vadd.f32 %v339, 0.05243302
      %v341 = vmul.f32 %v334, %v340
      %v342 = vadd.f32 %v341, 0.18741608
      %v343 = vmul.f32 %v334, %v342
      %v344 = vadd.f32 %v343, 1.1283791
      %v345 = vmul.f32 %v332, %v344
      %v346 = vmul.f32 %v334, 3.8918573e-05
      %v347 = vadd.f32 %v346, 0.001143296
      %v348 = vmul.f32 %v334, %v347
      %v349 = vadd.f32 %v348, 0.014752088
      %v350 = vmul.f32 %v334, %v349
      %v351 = vadd.f32 %v350, 0.112945676
      %v352 = vmul.f32 %v334, %v351
      %v353 = vadd.f32 %v352, 0.4994258
      %v354 = vmul.f32 %v334, %v353
      %v355 = vadd.f32 %v354, 1.0
      %v356 = vrcp.pop %v355
      %v357 = vmul.f32 %v355, %v356
      %v358 = vsub.f32 1.0, %v357
      %v359 = vmul.f32 %v356, %v358
      %v360 = vadd.f32 %v356, %v359
      %vm361 = vweird.f32 %v355
      %vm362 = vweird.f32 %v356
      %vm363 = vmor %vm361, %vm362
      %v364 = vsel %vm363, %v356, %v360
      %v365 = vand.u32 2147483647, %v355
      %vm366 = vcmp.eq.f32.partialorder %v365, 8.507059e+37
      %v367 = vand.u32 %v355, 2147483648
      %v368 = vor.u32 1.1754944e-38, %v367
      %v369 = vsel %vm366, %v368, %v364
      %v370 = vmul.f32 %v345, %v369
      %v371 = vmin.f32 %v370, 1.0
      %v372 = vmax.f32 %v371, -1.0
      %v373 = vadd.f32 %v372, 1.0
      %v374 = vmul.f32 %v331, %v373
      %v375 = vld [vmem:[%s284] sm:$0xff]
      %v376 = vld [vmem:[%s279] sm:$0xff]
      %v377 = vld [vmem:[%s279 + $0x8] sm:$0xff]
      %v378 = vld [vmem:[%s279 + $0x10] sm:$0xff]
      %v379 = vld [vmem:[%s279 + $0x18] sm:$0xff]
      %v380 = vld [vmem:[%s279 + $0x20] sm:$0xff]
      %v381 = vld [vmem:[%s279 + $0x28] sm:$0xff]
      %v382 = vld [vmem:[%s279 + $0x30] sm:$0xff]
      %v383 = vld [vmem:[%s279 + $0x38] sm:$0xff]
      %v384 = vld [vmem:[%s279 + $0x40] sm:$0xff]
      %v385 = vld [vmem:[%s279 + $0x48] sm:$0xff]
      %v386 = vld [vmem:[%s279 + $0x50] sm:$0xff]
      %v387 = vld [vmem:[%s279 + $0x58] sm:$0xff]
      %v388 = vld [vmem:[%s279 + $0x60] sm:$0xff]
      %v389 = vld [vmem:[%s279 + $0x68] sm:$0xff]
      %v390 = vld [vmem:[%s279 + $0x70] sm:$0xff]
      %v391 = vld [vmem:[%s279 + $0x78] sm:$0xff]
      %392 = vmatpush.msra.mxu0 %v391
      %393 = vmatpush.msra.mxu0 %v390
      %394 = vmatpush.msra.mxu0 %v389
      %395 = vmatpush.msra.mxu0 %v388
      %396 = vmatpush.msra.mxu0 %v387
      %397 = vmatpush.msra.mxu0 %v386
      %398 = vmatpush.msra.mxu0 %v385
      %399 = vmatpush.msra.mxu0 %v384
      %400 = vmatpush.msra.mxu0 %v383
      %401 = vmatpush.msra.mxu0 %v382
      %402 = vmatpush.msra.mxu0 %v381
      %403 = vmatpush.msra.mxu0 %v380
      %404 = vmatpush.msra.mxu0 %v379
      %405 = vmatpush.msra.mxu0 %v378
      %406 = vmatpush.msra.mxu0 %v377
      %407 = vmatpush.msra.mxu0 %v376
      %408 = vmatmul.f32.gmra.mxu0 %v374
      %v409 = vpop.f32.mrf.mxu0
      %v410 = vadd.f32 0.0, %v409
      %411 = vdwg.mxu0
      %v412 = vadd.f32 %v375, %v410
      %413 = vst [vmem:[%s284] sm:$0xff] %v412
      // Predicated region
      $region45: #{mlp_pallas.1} parent=39 // pred_check
        %p414 = pneg %p285
      $region46: #{mlp_pallas.1} parent=39 // pred_check_branch
        %416 = sbr.rel (%p414) target = $region48
      $region47: #{mlp_pallas.1} parent=39 // pred_region
        %v417 = vld [vmem:[%s284] sm:$0xff]
        %v418 = vld [vmem:[%s4] sm:$0x1]
        %v420 = vperm.slane %v418, 0
        %v422 = vadd.f32 %v417, %v420
        %423 = vst [vmem:[%s284] sm:$0xff] %v422
      $region48: #{mlp_pallas.1} parent=39 // pred_fallthru
        _
      %p424 = scmp.lt.s32.totalorder %s20, 1
      %s425 = scalar_select %p424, %s20, 1
      %s426 = smul.addr %s425, 8
      %s427 = scalar_lea.vmem %s5, %s426
      // Predicated region
      $region49: #{mlp_pallas.1} parent=39 // pred_check
        %p428 = pneg %p171
      $region50: #{mlp_pallas.1} parent=39 // pred_check_branch
        %430 = sbr.rel (%p428) target = $region52
      $region51: #{mlp_pallas.1} parent=39 // pred_region
        _
      $region52: #{mlp_pallas.1} parent=39 // pred_fallthru
        _
    $region40: #{mlp_pallas.1} parent=5 // pred_fallthru
      _
    %p431 = scmp.le.s32.totalorder 2, %s11
    // Predicated region
    $region53: #{mlp_pallas.1} parent=5 // pred_check
      %p432 = pneg %p431
    $region54: #{mlp_pallas.1} parent=5 // pred_check_branch
      %434 = sbr.rel (%p432) target = $region56
    $region55: #{mlp_pallas.1} parent=5 // pred_region
      %s435 = ssub.s32 %s11, 2
      // Predicated region
      $region57: #{mlp_pallas.1} parent=55 // pred_check
        %p436 = pneg %p177
      $region58: #{mlp_pallas.1} parent=55 // pred_check_branch
        %438 = sbr.rel (%p436) target = $region60
      $region59: #{mlp_pallas.1} parent=55 // pred_region
        %p439 = scmp.lt.s32.totalorder %s22, 1
        %s440 = scalar_select %p439, %s22, 1
        %s441 = smul.addr %s440, 8
        %s442 = scalar_lea.vmem %s5, %s441
      $region60: #{mlp_pallas.1} parent=55 // pred_fallthru
        _
    $region56: #{mlp_pallas.1} parent=5 // pred_fallthru
      _
  $region6: #{mlp_pallas.1} parent=0 // loop_footer
    %s15 = sadd.s32 1, %s11
  $region7: #{mlp_pallas.1} parent=0 // loop_footer_branch
    %10 = sbr.rel target = $region3
  $region8: #{mlp_pallas.1} parent=0 // loop_exit
    _

</llo_original>
